<compile_context>
chip_gen: v7x
topology: tpu7x:2x2x1
jax: 0.10.0
libtpu: 0.0.40
codegen_flags: <defaults>
</compile_context>

<pallas_src>
import functools

import jax
import jax.numpy as jnp
from jax import lax
from jax.experimental import pallas as pl
from jax.experimental.pallas import tpu as pltpu


def _round_up(x, m):
    return -(-x // m) * m


# --------------------------------------------------------------------------- kernel


def jigsaw_head_kernel(x_ref, w1_ref, b1_ref, w2_ref, b2_ref, wc_ref, bc_ref,
                       o_ref, acc_ref, *, inv_hw, C, HW, mask_c, mask_hw):
    """Grid = (B tiles, C tiles, HW tiles).

    x_ref:  (tb, tc, thw)   input block (channels on sublanes, HW on lanes)
    w1_ref: (tc, hidden)    slice of the (row-padded) first weight, same C block index as x
    acc_ref:(tb, hidden)    f32 scratch: running sum over (C, HW) blocks of  sum_HW(x) @ W1
    """
    j = pl.program_id(1)            # C-reduction step
    k = pl.program_id(2)            # HW-reduction step
    last = (j == pl.num_programs(1) - 1) & (k == pl.num_programs(2) - 1)

    @pl.when((j == 0) & (k == 0))
    def _init():
        acc_ref[...] = jnp.zeros_like(acc_ref)

    xv = x_ref[...]                                           # (tb, tc, thw)
    if mask_hw:                                               # trace-time gate: HW tail tile exists
        thw = xv.shape[-1]
        hw_ids = k * thw + lax.broadcasted_iota(jnp.int32, xv.shape, 2)
        xv = jnp.where(hw_ids < HW, xv, jnp.zeros_like(xv))

    # Partial global-average-pool: sum this (C, HW) block over HW, accumulating in f32.
    partial = jnp.sum(xv, axis=-1, dtype=jnp.float32)         # (tb, tc)
    if mask_c:                                                # trace-time gate: C tail tile exists
        tc = partial.shape[-1]
        c_ids = j * tc + lax.broadcasted_iota(jnp.int32, partial.shape, 1)
        partial = jnp.where(c_ids < C, partial, 0.0)

    # Fold Conv2d(C, hidden, 1) into the reduction: dot is linear in its lhs, so summing
    # the per-block dots over all (C, HW) blocks equals (sum_{H,W} x) @ W1.
    acc_ref[...] += jnp.dot(partial, w1_ref[...], preferred_element_type=jnp.float32)

    @pl.when(last)
    def _finalize():
        h1 = jnp.maximum(acc_ref[...] * inv_hw + b1_ref[...], 0.0)        # relu(pooled @ W1 + b1)
        h2 = jnp.dot(h1, w2_ref[...], preferred_element_type=jnp.float32) + b2_ref[...]
        h2 = jnp.maximum(h2, 0.0)                                         # relu(h1 @ W2 + b2)
        out = jnp.dot(h2, wc_ref[...], preferred_element_type=jnp.float32) + bc_ref[...]
        # num_classes < 128 -> masked partial store, but it only happens once per B tile.
        o_ref[...] = out.astype(o_ref.dtype)


# ------------------------------------------------------------------- tiling / budget


def _vmem_capacity_bytes():
    """Per-core VMEM capacity; conservative v7x-sized (64 MiB) fallback if the query fails."""
    try:
        cap = int(pltpu.get_tpu_info().vmem_capacity_bytes)
        if cap > 0:
            return cap
    except Exception:
        pass
    return 64 * 1024 * 1024


def _plan_tiles(B, C, HW, hidden, ncls, x_item, w_item, out_item, budget):
    """Jointly choose (tb, tc, thw) so that
         2*x_block + 2*w1_block + 2*(resident weights/biases) + 2*out_block + acc
       fits `budget` bytes of VMEM.  Preference: full HW (long contiguous DMA runs),
       then the largest tc, shrinking tb next; HW is split only as a last resort.
       For B >= 16 the B axis gets >= 2 blocks (megacore on v7x)."""
    hid_l = _round_up(hidden, 128)
    ncls_l = _round_up(ncls, 128)
    hw_l = _round_up(HW, 128)

    def const_bytes(tb):
        b = 2 * 8 * hid_l * w_item                        # b1 (double-buffered)
        b += 2 * _round_up(hidden, 8) * hid_l * w_item    # w2
        b += 2 * 8 * hid_l * w_item                       # b2
        b += 2 * _round_up(hidden, 8) * ncls_l * w_item   # wc
        b += 2 * 8 * ncls_l * w_item                      # bc
        b += 2 * _round_up(tb, 8) * ncls_l * out_item     # output block
        b += _round_up(tb, 8) * hid_l * 4                 # f32 accumulator scratch
        return b

    # B-tile candidates (output block rule: tb must be a multiple of 8 or equal to B).
    if B >= 16:
        tb_cands = []
        t = min(128, max(8, (B // 2) // 8 * 8))           # guarantees >= 2 blocks on the B axis
        while t >= 8:
            tb_cands.append(t)
            t //= 2
    else:
        tb_cands = [B]                                    # cannot split: tb < 8 and tb != B is illegal

    for tb in tb_cands:
        avail = budget - const_bytes(tb)
        if avail <= 0:
            continue
        # Bytes per channel: double-buffered x row-slab (full HW) + double-buffered w1 row.
        per_chan = 2 * tb * hw_l * x_item + 2 * hid_l * w_item
        max_tc = avail // per_chan
        if max_tc >= C:
            return int(tb), int(C), int(HW)
        tc = (max_tc // 8) * 8
        if tc >= 8:
            return int(tb), int(tc), int(HW)

    # Even (tc=8, full HW) does not fit at the smallest tb: split the HW axis too.
    tb = tb_cands[-1]
    tc = C if C <= 8 else 8
    avail = budget - const_bytes(tb) - 2 * _round_up(tc, 8) * hid_l * w_item
    per_hw = 2 * tb * _round_up(tc, 8) * x_item
    max_thw = (max(avail, 0) // per_hw) // 128 * 128
    thw = min(max(128, int(max_thw)), HW)
    return int(tb), int(tc), int(thw)


def _cap_tb(tb, cap, B):
    if cap is None:
        return tb
    t = min(tb, max(1, cap))
    if t >= B:
        return B
    t = (t // 8) * 8
    return t if t >= 8 else B


def _cap_tc(tc, cap, C):
    if cap is None:
        return tc
    t = min(tc, max(1, cap))
    if t >= C:
        return C
    return max(8, (t // 8) * 8)


def _cap_thw(thw, cap, HW):
    if cap is None:
        return thw
    t = min(thw, max(1, cap))
    if t >= HW:
        return HW
    return max(128, (t // 128) * 128)


# ----------------------------------------------------------------------- entry point


def jigsaw_head_forward(x_nchw, params, *, max_block_b=None, max_block_c=None,
                        max_block_hw=None):
    """JigsawHead (non-legacy) forward.  x_nchw: (B, C, H, W).
    params: w1 (C, hidden), b1 (1, hidden), w2 (hidden, hidden), b2 (1, hidden),
            wc (hidden, num_classes), bc (1, num_classes)."""
    B, C, H, W = x_nchw.shape
    HW = H * W
    x = x_nchw.reshape(B, C, HW)   # free reshape: channels on sublanes, HW on lanes

    w1, b1 = params["w1"], params["b1"]
    w2, b2 = params["w2"], params["b2"]
    wc, bc = params["wc"], params["bc"]
    hidden = w1.shape[1]
    num_classes = wc.shape[1]

    cap = _vmem_capacity_bytes()
    budget = int(cap * 0.60)       # headroom for Mosaic internal scratch, semaphores, slop
    vmem_limit = int(cap * 0.72)   # explicit scoped-VMEM limit (v5e default of 16 MiB is too low)

    tb, tc, thw = _plan_tiles(B, C, HW, hidden, num_classes,
                              x.dtype.itemsize, w1.dtype.itemsize, x.dtype.itemsize, budget)
    tb = _cap_tb(tb, max_block_b, B)
    tc = _cap_tc(tc, max_block_c, C)
    thw = _cap_thw(thw, max_block_hw, HW)

    nb, nc, nhw = pl.cdiv(B, tb), pl.cdiv(C, tc), pl.cdiv(HW, thw)

    # Zero-pad w1 rows up to the C grid so the last w1 block never contains OOB garbage;
    # the matching garbage channels of x are masked to zero in the kernel.
    c_pad = nc * tc
    if c_pad != C:
        w1 = jnp.pad(w1, ((0, c_pad - C), (0, 0)))

    kernel = functools.partial(
        jigsaw_head_kernel, inv_hw=1.0 / HW, C=C, HW=HW,
        mask_c=(c_pad != C), mask_hw=(nhw * thw != HW))

    const2d = lambda shape: pl.BlockSpec(shape, lambda i, j, k: (0, 0))

    return pl.pallas_call(
        kernel,
        out_shape=jax.ShapeDtypeStruct((B, num_classes), x_nchw.dtype),
        grid_spec=pltpu.PrefetchScalarGridSpec(
            num_scalar_prefetch=0,
            grid=(nb, nc, nhw),
            in_specs=[
                pl.BlockSpec((tb, tc, thw), lambda i, j, k: (i, j, k)),   # x block (full HW preferred)
                pl.BlockSpec((tc, hidden), lambda i, j, k: (j, 0)),       # w1 slice (same C block as x)
                const2d((1, hidden)),                                     # b1 (block-invariant)
                const2d((hidden, hidden)),                                # w2
                const2d((1, hidden)),                                     # b2
                const2d((hidden, num_classes)),                           # wc
                const2d((1, num_classes)),                                # bc
            ],
            # Output block index depends only on i -> VMEM-resident across both reduction
            # axes; written once per B tile inside the finalize step.
            out_specs=pl.BlockSpec((tb, num_classes), lambda i, j, k: (i, 0)),
            scratch_shapes=[pltpu.VMEM((tb, hidden), jnp.float32)],       # fused pooled@W1 accumulator
        ),
        compiler_params=pltpu.CompilerParams(
            dimension_semantics=("parallel", "arbitrary", "arbitrary"),
            vmem_limit_bytes=vmem_limit,
        ),
    )(x, w1, b1, w2, b2, wc, bc)


def reference_forward(x_nchw, params):
    pooled = jnp.mean(x_nchw, axis=(2, 3))                       # (B, C)
    h1 = jnp.maximum(pooled @ params["w1"] + params["b1"], 0.0)  # (B, hidden)
    h2 = jnp.maximum(h1 @ params["w2"] + params["b2"], 0.0)      # (B, hidden)
    return h2 @ params["wc"] + params["bc"]                      # (B, num_classes)


# ------------------------------------------------------------------------------ test

if __name__ == "__main__":
    HIDDEN = 32
    NUM_CLASSES = 8

    def make_params(key, C, hidden, ncls, dtype=jnp.float32):
        ks = jax.random.split(key, 6)
        return {
            "w1": jax.random.normal(ks[0], (C, hidden), dtype) * 0.1,
            "b1": jax.random.normal(ks[1], (1, hidden), dtype) * 0.1,
            "w2": jax.random.normal(ks[2], (hidden, hidden), dtype) * 0.1,
            "b2": jax.random.normal(ks[3], (1, hidden), dtype) * 0.1,
            "wc": jax.random.normal(ks[4], (hidden, ncls), dtype) * 0.1,
            "bc": jax.random.normal(ks[5], (1, ncls), dtype) * 0.1,
        }

    key = jax.random.PRNGKey(0)
    k1, k2, k3, k4, k5, k6 = jax.random.split(key, 6)

    # Case 1: small canonical shape, auto-planned tiles (single fused step per B tile).
    B, C, H, W = 2, 16, 16, 16
    x = jax.random.normal(k1, (B, C, H, W), dtype=jnp.float32)
    params = make_params(k2, C, HIDDEN, NUM_CLASSES)
    out = jax.block_until_ready(jigsaw_head_forward(x, params))
    ref = reference_forward(x, params)
    assert out.shape == (B, NUM_CLASSES)
    assert jnp.allclose(out, ref, atol=1e-4, rtol=1e-4), "case 1 mismatch vs reference"

    # Case 2: non-divisible C and HW with forced small tiles -> exercises the blocked C/HW
    # reduction, accumulator init/finalize gating, tail masking and w1 zero-padding.
    B2, C2, H2, W2 = 2, 20, 12, 12          # HW = 144 (not a multiple of 128), C % 8 != 0
    x2 = jax.random.normal(k3, (B2, C2, H2, W2), dtype=jnp.float32)
    params2 = make_params(k4, C2, HIDDEN, NUM_CLASSES)
    out2 = jax.block_until_ready(
        jigsaw_head_forward(x2, params2, max_block_c=8, max_block_hw=128))
    ref2 = reference_forward(x2, params2)
    assert jnp.allclose(out2, ref2, atol=1e-4, rtol=1e-4), "case 2 mismatch vs reference"

    # Case 3: non-divisible B (B=18, tb=8 -> partial last B tile masked by Pallas).
    B3, C3, H3, W3 = 18, 8, 8, 8
    x3 = jax.random.normal(k5, (B3, C3, H3, W3), dtype=jnp.float32)
    params3 = make_params(k6, C3, HIDDEN, NUM_CLASSES)
    out3 = jax.block_until_ready(jigsaw_head_forward(x3, params3))
    ref3 = reference_forward(x3, params3)
    assert jnp.allclose(out3, ref3, atol=1e-4, rtol=1e-4), "case 3 mismatch vs reference"

    # TODO(synk): legacy_arch branch (Linear->ReLU->Dropout stack) not implemented; dropout
    # is a no-op in eval mode and the default arch is the conv path implemented here.
    print("KERNEL_OK")
</pallas_src>

<mosaic_0001>
module attributes {stable_mosaic.version = 11 : i64} {
  func.func @jigsaw_head_kernel(%arg0: i32, %arg1: i32, %arg2: i32, %arg3: memref<2x16x256xf32, #tpu.memory_space<vmem>>, %arg4: memref<16x32xf32, #tpu.memory_space<vmem>>, %arg5: memref<1x32xf32, #tpu.memory_space<vmem>>, %arg6: memref<32x32xf32, #tpu.memory_space<vmem>>, %arg7: memref<1x32xf32, #tpu.memory_space<vmem>>, %arg8: memref<32x8xf32, #tpu.memory_space<vmem>>, %arg9: memref<1x8xf32, #tpu.memory_space<vmem>>, %arg10: memref<2x8xf32, #tpu.memory_space<vmem>>, %arg11: memref<2x32xf32, #tpu.memory_space<vmem>>) attributes {dimension_semantics = [#tpu.dimension_semantics<parallel>, #tpu.dimension_semantics<arbitrary>, #tpu.dimension_semantics<arbitrary>], iteration_bounds = array<i64: 1, 1, 1>, scalar_prefetch = 0 : i64, scratch_operands = 1 : i64, tpu.core_type = #tpu.core_type<tc>, window_params = [{transform_indices = @transform_0, window_bounds = array<i64: 2, 16, 256>}, {transform_indices = @transform_1, window_bounds = array<i64: 16, 32>}, {pipeline_mode = #tpu.pipeline_mode<synchronous>, transform_indices = @transform_2, window_bounds = array<i64: 1, 32>}, {pipeline_mode = #tpu.pipeline_mode<synchronous>, transform_indices = @transform_3, window_bounds = array<i64: 32, 32>}, {pipeline_mode = #tpu.pipeline_mode<synchronous>, transform_indices = @transform_4, window_bounds = array<i64: 1, 32>}, {pipeline_mode = #tpu.pipeline_mode<synchronous>, transform_indices = @transform_5, window_bounds = array<i64: 32, 8>}, {pipeline_mode = #tpu.pipeline_mode<synchronous>, transform_indices = @transform_6, window_bounds = array<i64: 1, 8>}, {transform_indices = @transform_7, window_bounds = array<i64: 2, 8>}]} {
    %c0_i32 = arith.constant 0 : i32
    %0 = arith.cmpi eq, %arg1, %c0_i32 : i32
    %c0_i32_0 = arith.constant 0 : i32
    %1 = arith.cmpi eq, %arg2, %c0_i32_0 : i32
    %2 = arith.andi %0, %1 : i1
    %c0_i32_1 = arith.constant 0 : i32
    %3 = arith.cmpi eq, %arg1, %c0_i32_1 : i32
    %c0_i32_2 = arith.constant 0 : i32
    %4 = arith.cmpi eq, %arg2, %c0_i32_2 : i32
    %5 = arith.andi %3, %4 : i1
    %6 = arith.extui %5 : i1 to i32
    %c0_i32_3 = arith.constant 0 : i32
    %7 = arith.cmpi ne, %6, %c0_i32_3 : i32
    scf.if %7 {
      %cst_14 = arith.constant 0.000000e+00 : f32
      %17 = vector.broadcast %cst_14 : f32 to vector<2x32xf32>
      %c0_15 = arith.constant 0 : index
      %c0_16 = arith.constant 0 : index
      %18 = vector.load %arg11[%c0_15, %c0_16] : memref<2x32xf32, #tpu.memory_space<vmem>>, vector<2x32xf32>
      tpu.vector_store %arg11[%c0_15, %c0_16], %17 {strides = array<i32>} : memref<2x32xf32, #tpu.memory_space<vmem>>, vector<2x32xf32>,
    } else {
    }
    %c0 = arith.constant 0 : index
    %c0_4 = arith.constant 0 : index
    %c0_5 = arith.constant 0 : index
    %8 = vector.load %arg3[%c0, %c0_4, %c0_5] : memref<2x16x256xf32, #tpu.memory_space<vmem>>, vector<2x16x256xf32>
    %cst = arith.constant dense<0.000000e+00> : vector<2x16xf32>
    %9 = vector.multi_reduction <add>, %8, %cst [2] : vector<2x16x256xf32> to vector<2x16xf32>
    %c0_6 = arith.constant 0 : index
    %c0_7 = arith.constant 0 : index
    %10 = vector.load %arg11[%c0_6, %c0_7] : memref<2x32xf32, #tpu.memory_space<vmem>>, vector<2x32xf32>
    %c0_8 = arith.constant 0 : index
    %c0_9 = arith.constant 0 : index
    %11 = vector.load %arg4[%c0_8, %c0_9] : memref<16x32xf32, #tpu.memory_space<vmem>>, vector<16x32xf32>
    %cst_10 = arith.constant dense<0.000000e+00> : vector<2x32xf32>
    %12 = tpu.matmul %9, %11, %cst_10 {dimension_numbers = #tpu.dot_dimension_numbers<[1], [0], [0], [1], [0, 0, 1, 1], [], []>} : vector<2x16xf32>, vector<16x32xf32>, vector<2x32xf32> -> vector<2x32xf32>
    %13 = arith.addf %10, %12 : vector<2x32xf32>
    %c0_11 = arith.constant 0 : index
    %c0_12 = arith.constant 0 : index
    %14 = vector.load %arg11[%c0_11, %c0_12] : memref<2x32xf32, #tpu.memory_space<vmem>>, vector<2x32xf32>
    tpu.vector_store %arg11[%c0_11, %c0_12], %13 {strides = array<i32>} : memref<2x32xf32, #tpu.memory_space<vmem>>, vector<2x32xf32>,
    %15 = arith.extui %2 : i1 to i32
    %c0_i32_13 = arith.constant 0 : i32
    %16 = arith.cmpi ne, %15, %c0_i32_13 : i32
    scf.if %16 {
      %c0_14 = arith.constant 0 : index
      %c0_15 = arith.constant 0 : index
      %17 = vector.load %arg11[%c0_14, %c0_15] : memref<2x32xf32, #tpu.memory_space<vmem>>, vector<2x32xf32>
      %cst_16 = arith.constant 3.906250e-03 : f32
      %18 = vector.broadcast %cst_16 : f32 to vector<2x32xf32>
      %19 = arith.mulf %17, %18 : vector<2x32xf32>
      %c0_17 = arith.constant 0 : index
      %c0_18 = arith.constant 0 : index
      %20 = vector.load %arg5[%c0_17, %c0_18] : memref<1x32xf32, #tpu.memory_space<vmem>>, vector<1x32xf32>
      %21 = vector.broadcast %20 : vector<1x32xf32> to vector<2x32xf32>
      %22 = arith.addf %19, %21 : vector<2x32xf32>
      %cst_19 = arith.constant 0.000000e+00 : f32
      %23 = vector.broadcast %cst_19 : f32 to vector<2x32xf32>
      %24 = arith.maximumf %22, %23 : vector<2x32xf32>
      %c0_20 = arith.constant 0 : index
      %c0_21 = arith.constant 0 : index
      %25 = vector.load %arg6[%c0_20, %c0_21] : memref<32x32xf32, #tpu.memory_space<vmem>>, vector<32x32xf32>
      %cst_22 = arith.constant dense<0.000000e+00> : vector<2x32xf32>
      %26 = tpu.matmul %24, %25, %cst_22 {dimension_numbers = #tpu.dot_dimension_numbers<[1], [0], [0], [1], [0, 0, 1, 1], [], []>} : vector<2x32xf32>, vector<32x32xf32>, vector<2x32xf32> -> vector<2x32xf32>
      %c0_23 = arith.constant 0 : index
      %c0_24 = arith.constant 0 : index
      %27 = vector.load %arg7[%c0_23, %c0_24] : memref<1x32xf32, #tpu.memory_space<vmem>>, vector<1x32xf32>
      %28 = vector.broadcast %27 : vector<1x32xf32> to vector<2x32xf32>
      %29 = arith.addf %26, %28 : vector<2x32xf32>
      %cst_25 = arith.constant 0.000000e+00 : f32
      %30 = vector.broadcast %cst_25 : f32 to vector<2x32xf32>
      %31 = arith.maximumf %29, %30 : vector<2x32xf32>
      %c0_26 = arith.constant 0 : index
      %c0_27 = arith.constant 0 : index
      %32 = vector.load %arg8[%c0_26, %c0_27] : memref<32x8xf32, #tpu.memory_space<vmem>>, vector<32x8xf32>
      %cst_28 = arith.constant dense<0.000000e+00> : vector<2x8xf32>
      %33 = tpu.matmul %31, %32, %cst_28 {dimension_numbers = #tpu.dot_dimension_numbers<[1], [0], [0], [1], [0, 0, 1, 1], [], []>} : vector<2x32xf32>, vector<32x8xf32>, vector<2x8xf32> -> vector<2x8xf32>
      %c0_29 = arith.constant 0 : index
      %c0_30 = arith.constant 0 : index
      %34 = vector.load %arg9[%c0_29, %c0_30] : memref<1x8xf32, #tpu.memory_space<vmem>>, vector<1x8xf32>
      %35 = vector.broadcast %34 : vector<1x8xf32> to vector<2x8xf32>
      %36 = arith.addf %33, %35 : vector<2x8xf32>
      %c0_31 = arith.constant 0 : index
      %c0_32 = arith.constant 0 : index
      %37 = vector.load %arg10[%c0_31, %c0_32] : memref<2x8xf32, #tpu.memory_space<vmem>>, vector<2x8xf32>
      tpu.vector_store %arg10[%c0_31, %c0_32], %36 {strides = array<i32>} : memref<2x8xf32, #tpu.memory_space<vmem>>, vector<2x8xf32>,
    } else {
    }
    return
  }
  func.func @transform_0(%arg0: i32, %arg1: i32, %arg2: i32) -> (i32, i32, i32) {
    %c0_i32 = arith.constant 0 : i32
    return %arg0, %arg1, %arg2 : i32, i32, i32
  }
  func.func @transform_1(%arg0: i32, %arg1: i32, %arg2: i32) -> (i32, i32) {
    %c0_i32 = arith.constant 0 : i32
    %c0_i32_0 = arith.constant 0 : i32
    return %arg1, %c0_i32 : i32, i32
  }
  func.func @transform_2(%arg0: i32, %arg1: i32, %arg2: i32) -> (i32, i32) {
    %c0_i32 = arith.constant 0 : i32
    %c0_i32_0 = arith.constant 0 : i32
    %c0_i32_1 = arith.constant 0 : i32
    return %c0_i32, %c0_i32_0 : i32, i32
  }
  func.func @transform_3(%arg0: i32, %arg1: i32, %arg2: i32) -> (i32, i32) {
    %c0_i32 = arith.constant 0 : i32
    %c0_i32_0 = arith.constant 0 : i32
    %c0_i32_1 = arith.constant 0 : i32
    return %c0_i32, %c0_i32_0 : i32, i32
  }
  func.func @transform_4(%arg0: i32, %arg1: i32, %arg2: i32) -> (i32, i32) {
    %c0_i32 = arith.constant 0 : i32
    %c0_i32_0 = arith.constant 0 : i32
    %c0_i32_1 = arith.constant 0 : i32
    return %c0_i32, %c0_i32_0 : i32, i32
  }
  func.func @transform_5(%arg0: i32, %arg1: i32, %arg2: i32) -> (i32, i32) {
    %c0_i32 = arith.constant 0 : i32
    %c0_i32_0 = arith.constant 0 : i32
    %c0_i32_1 = arith.constant 0 : i32
    return %c0_i32, %c0_i32_0 : i32, i32
  }
  func.func @transform_6(%arg0: i32, %arg1: i32, %arg2: i32) -> (i32, i32) {
    %c0_i32 = arith.constant 0 : i32
    %c0_i32_0 = arith.constant 0 : i32
    %c0_i32_1 = arith.constant 0 : i32
    return %c0_i32, %c0_i32_0 : i32, i32
  }
  func.func @transform_7(%arg0: i32, %arg1: i32, %arg2: i32) -> (i32, i32) {
    %c0_i32 = arith.constant 0 : i32
    %c0_i32_0 = arith.constant 0 : i32
    return %arg0, %c0_i32 : i32, i32
  }
}

</mosaic_0001>

<llo_original>
// kernel: tpu_custom_call.1
$region0: #{tpu_custom_call.1}
  #allocation0 [shape = 'u32[]', space=smem, size = 0x4, offset = 0x4, fixed_abs, tag = 'smem constant byte address 0x4 - core index']
  #allocation1 [shape = 'u32[144,128]{1,0:T(1,128)}', space=vmem, size = 0x12000, scoped, tag = 'internal scratch']
  #allocation2 [shape = 'f32[2,32]{1,0:T(2,128)}', space=vmem, size = 0x400, scoped, tag = 'scratch operand']
  %s0 = inlined_call_operand.hbm [shape: f32[2,16,256], index: 0, kind: input, shape index: {}]
  %s1 = inlined_call_operand.vmem [shape: f32[16,32], index: 1, kind: input, shape index: {}]
  %s2 = inlined_call_operand.vmem [shape: f32[1,32], index: 2, kind: input, shape index: {}]
  %s3 = inlined_call_operand.vmem [shape: f32[32,32], index: 3, kind: input, shape index: {}]
  %s4 = inlined_call_operand.vmem [shape: f32[1,32], index: 4, kind: input, shape index: {}]
  %s5 = inlined_call_operand.vmem [shape: f32[32,8], index: 5, kind: input, shape index: {}]
  %s6 = inlined_call_operand.vmem [shape: f32[1,8], index: 6, kind: input, shape index: {}]
  %s7 = inlined_call_operand.hbm [shape: f32[2,8], index: 7, kind: output, shape index: {}]
  %s8 = sld [smem:[#allocation0]]
  $region50: #{tpu_custom_call.1} parent=0
    _
  %s10 = ssub.s32 1, %s8
  %s11 = scalar_select 0, %s10, %s8
  $region1: #{tpu_custom_call.1} parent=0
    #allocation3 [shape = 'u8[32768]{0}', space=vmem, size = 0x8000, scoped, tag = 'input window, operand 0, single buffered']
    #allocation4 [shape = 's32[1]{0}', space=sflag, size = 0x4, scoped, tag = 'scoped memory for tpu_custom_call.1']
    #allocation5 [shape = 's32[1]{0}', space=sflag, size = 0x4, scoped, tag = 'scoped memory for tpu_custom_call.1']
    #allocation6 [shape = 'u8[1024]{0}', space=vmem, size = 0x400, scoped, tag = 'output window, operand 0, single buffered']
    %12 = vsyncpa [#allocation4], 0
    %13 = vsyncpa [#allocation5], 0
    // Predicated region
    $region2: #{tpu_custom_call.1} parent=1 // pred_check
      _
    $region3: #{tpu_custom_call.1} parent=1 // pred_check_branch
      %15 = sbr.rel (0) target = $region5
    $region4: #{tpu_custom_call.1} parent=1 // pred_region
      %s17 = ssub.s32 1024, 1024
      %18 = vsyncadd [#allocation4], %s17
      %s19 = sshll.u32 [#allocation3], 4
      %s20 = int_to_ptr.vmem [resolvable:$true] %s19
      %25 = dma.hbm_to_vmem [thread:$0]  %s0, 1024, %s20, [#allocation4], 256, 256, 16
    $region5: #{tpu_custom_call.1} parent=1 // pred_fallthru
      _
    // Predicated region
    $region6: #{tpu_custom_call.1} parent=1 // pred_check
      _
    $region7: #{tpu_custom_call.1} parent=1 // pred_check_branch
      %27 = sbr.rel (0) target = $region9
    $region8: #{tpu_custom_call.1} parent=1 // pred_region
      _
    $region9: #{tpu_custom_call.1} parent=1 // pred_fallthru
      _
    // Predicated region
    $region10: #{tpu_custom_call.1} parent=1 // pred_check
      _
    $region11: #{tpu_custom_call.1} parent=1 // pred_check_branch
      %29 = sbr.rel (0) target = $region13
    $region12: #{tpu_custom_call.1} parent=1 // pred_region
      _
    $region13: #{tpu_custom_call.1} parent=1 // pred_fallthru
      _
    // Predicated region
    $region14: #{tpu_custom_call.1} parent=1 // pred_check
      _
    $region15: #{tpu_custom_call.1} parent=1 // pred_check_branch
      %31 = sbr.rel (0) target = $region17
    $region16: #{tpu_custom_call.1} parent=1 // pred_region
      _
    $region17: #{tpu_custom_call.1} parent=1 // pred_fallthru
      _
    // Predicated region
    $region18: #{tpu_custom_call.1} parent=1 // pred_check
      _
    $region19: #{tpu_custom_call.1} parent=1 // pred_check_branch
      %33 = sbr.rel (0) target = $region21
    $region20: #{tpu_custom_call.1} parent=1 // pred_region
      _
    $region21: #{tpu_custom_call.1} parent=1 // pred_fallthru
      _
    // Predicated region
    $region22: #{tpu_custom_call.1} parent=1 // pred_check
      _
    $region23: #{tpu_custom_call.1} parent=1 // pred_check_branch
      %35 = sbr.rel (0) target = $region25
    $region24: #{tpu_custom_call.1} parent=1 // pred_region
      _
    $region25: #{tpu_custom_call.1} parent=1 // pred_fallthru
      _
    // Predicated region
    $region26: #{tpu_custom_call.1} parent=1 // pred_check
      _
    $region27: #{tpu_custom_call.1} parent=1 // pred_check_branch
      %37 = sbr.rel (0) target = $region29
    $region28: #{tpu_custom_call.1} parent=1 // pred_region
      _
    $region29: #{tpu_custom_call.1} parent=1 // pred_fallthru
      _
    // Predicated region
    $region30: #{tpu_custom_call.1} parent=1 // pred_check
      _
    $region31: #{tpu_custom_call.1} parent=1 // pred_check_branch
      %39 = sbr.rel (0) target = $region33
    $region32: #{tpu_custom_call.1} parent=1 // pred_region
      %40 = dma.done [#allocation4], 1024
    $region33: #{tpu_custom_call.1} parent=1 // pred_fallthru
      _
    %p41 = scmp.eq.s32.totalorder 0, 0
    %p42 = scmp.eq.s32.totalorder 0, 0
    %p43 = pnand %p41, %p42
    %p44 = pneg %p43
    // Predicated region
    $region34: #{tpu_custom_call.1} parent=1 // pred_check
      _
    $region35: #{tpu_custom_call.1} parent=1 // pred_check_branch
      %46 = sbr.rel (%p43) target = $region37
    $region36: #{tpu_custom_call.1} parent=1 // pred_region
      %vm47 = vcmask 254976
      %48 = vst.msk [vmem:[#allocation2] sm:$0x3] %vm47, 0.0
    $region37: #{tpu_custom_call.1} parent=1 // pred_fallthru
      _
    %v49 = vld [vmem:[#allocation3] sm:$0xff]
    %v50 = vld [vmem:[#allocation3 + $0x8] sm:$0xff]
    %v51 = vld [vmem:[#allocation3 + $0x10] sm:$0xff]
    %v52 = vld [vmem:[#allocation3 + $0x18] sm:$0xff]
    %v53 = vld [vmem:[#allocation3 + $0x20] sm:$0xff]
    %v54 = vld [vmem:[#allocation3 + $0x28] sm:$0xff]
    %v55 = vld [vmem:[#allocation3 + $0x30] sm:$0xff]
    %v56 = vld [vmem:[#allocation3 + $0x38] sm:$0xff]
    %v57 = vadd.f32 %v49, %v50
    %58 = vadd.xlane.f32.xlu0 %v57
    %v59 = vpop.xlane.xlu0 %58
    %v60 = vadd.f32 %v51, %v52
    %61 = vadd.xlane.f32.xlu0 %v60
    %v62 = vpop.xlane.xlu0 %61
    %v63 = vadd.f32 %v53, %v54
    %64 = vadd.xlane.f32.xlu0 %v63
    %v65 = vpop.xlane.xlu0 %64
    %v66 = vadd.f32 %v55, %v56
    %67 = vadd.xlane.f32.xlu0 %v66
    %v68 = vpop.xlane.xlu0 %67
    %v69 = vld [vmem:[#allocation2] sm:$0x3]
    %v70 = vld [vmem:[%s1] sm:$0xff]
    %v71 = vld [vmem:[%s1 + $0x8] sm:$0xff]
    %v76 = vlaneseq
    %v77 = vand.u32 %v76, 127
    %v78 = vlaneseq
    %v79 = vshrl.u32 %v78, 7
    %v80 = vsub.s32 %v77, %v79
    %v81 = vrot.slane %v59, %v80
    %v82 = vadd.s32 %v77, 4294967288
    %v83 = vlaneseq
    %v84 = vshrl.u32 %v83, 7
    %v85 = vsub.s32 %v82, %v84
    %v86 = vrot.slane %v62, %v85
    %vm87 = vcmask 130112
    %v88 = vsel %vm87, %v86, %v81
    %v89 = vlaneseq
    %v90 = vshrl.u32 %v89, 7
    %v91 = vsub.s32 %v77, %v90
    %v92 = vrot.slane %v65, %v91
    %v93 = vlaneseq
    %v94 = vshrl.u32 %v93, 7
    %v95 = vsub.s32 %v82, %v94
    %v96 = vrot.slane %v68, %v95
    %v97 = vsel %vm87, %v96, %v92
    %vm98 = vcmask 1041409
    %v99 = vsel %vm98, %v97, %v88
    %vm100 = vcmask 130048
    %v101 = vsel %vm100, %v99, 0
    %103 = vmatprep.subr.mxu0 0.0
    %104 = vmatpush1.msra.mxu0 %v70
    %105 = vmatprep.subr.mxu0 0.0
    %106 = vmatpush1.msra.mxu0 %v71
    %107 = vmatprep.subr.mxu0 0.0
    %108 = vmatpush1.msra.mxu0 0.0
    %109 = vmatprep.subr.mxu0 0.0
    %110 = vmatpush1.msra.mxu0 0.0
    %111 = vmatprep.subr.mxu0 0.0
    %112 = vmatpush1.msra.mxu0 0.0
    %113 = vmatprep.subr.mxu0 0.0
    %114 = vmatpush1.msra.mxu0 0.0
    %115 = vmatprep.subr.mxu0 0.0
    %116 = vmatpush1.msra.mxu0 0.0
    %117 = vmatprep.subr.mxu0 0.0
    %118 = vmatpush1.msra.mxu0 0.0
    %119 = vmatprep.subr.mxu0 0.0
    %120 = vmatpush1.msra.mxu0 0.0
    %121 = vmatprep.subr.mxu0 0.0
    %122 = vmatpush1.msra.mxu0 0.0
    %123 = vmatprep.subr.mxu0 0.0
    %124 = vmatpush1.msra.mxu0 0.0
    %125 = vmatprep.subr.mxu0 0.0
    %126 = vmatpush1.msra.mxu0 0.0
    %127 = vmatprep.subr.mxu0 0.0
    %128 = vmatpush1.msra.mxu0 0.0
    %129 = vmatprep.subr.mxu0 0.0
    %130 = vmatpush1.msra.mxu0 0.0
    %131 = vmatprep.subr.mxu0 0.0
    %132 = vmatpush1.msra.mxu0 0.0
    %133 = vmatprep.subr.mxu0 0.0
    %134 = vmatpush1.msra.mxu0 0.0
    %135 = vmatprep.subr.mxu0 0.0
    %136 = vmatpush1.msra.mxu0 0.0
    %137 = vmatprep.subr.mxu0 0.0
    %138 = vmatpush1.msra.mxu0 0.0
    %139 = vmatprep.subr.mxu0 0.0
    %140 = vmatpush1.msra.mxu0 0.0
    %141 = vmatprep.subr.mxu0 0.0
    %142 = vmatpush1.msra.mxu0 0.0
    %143 = vmatprep.subr.mxu0 0.0
    %144 = vmatpush1.msra.mxu0 0.0
    %145 = vmatprep.subr.mxu0 0.0
    %146 = vmatpush1.msra.mxu0 0.0
    %147 = vmatprep.subr.mxu0 0.0
    %148 = vmatpush1.msra.mxu0 0.0
    %149 = vmatprep.subr.mxu0 0.0
    %150 = vmatpush1.msra.mxu0 0.0
    %151 = vmatprep.subr.mxu0 0.0
    %152 = vmatpush1.msra.mxu0 0.0
    %153 = vmatprep.subr.mxu0 0.0
    %154 = vmatpush1.msra.mxu0 0.0
    %155 = vmatprep.subr.mxu0 0.0
    %156 = vmatpush1.msra.mxu0 0.0
    %157 = vmatprep.subr.mxu0 0.0
    %158 = vmatpush1.msra.mxu0 0.0
    %159 = vmatprep.subr.mxu0 0.0
    %160 = vmatpush1.msra.mxu0 0.0
    %161 = vmatprep.subr.mxu0 0.0
    %162 = vmatpush1.msra.mxu0 0.0
    %163 = vmatprep.subr.mxu0 0.0
    %164 = vmatpush1.msra.mxu0 0.0
    %165 = vmatprep.subr.mxu0 0.0
    %166 = vmatpush1.msra.mxu0 0.0
    %167 = vmatprep.mubr.f32.mxu0 0.0
    %168 = vmatmul.mubr.f32.gmra.mrb[0].mxu0 %v101
    %v169 = vpop.f32.mrb[0].mxu0
    %v170 = vadd.f32 0.0, %v169
    %v171 = vpop.f32.mrb[0].mxu0
    %172 = vdwg.mxu0
    %v173 = vadd.f32 %v69, %v170
    %vm174 = vcmask 254976
    %175 = vst.msk [vmem:[#allocation2] sm:$0x3] %vm174, %v173
    // Predicated region
    $region38: #{tpu_custom_call.1} parent=1 // pred_check
      _
    $region39: #{tpu_custom_call.1} parent=1 // pred_check_branch
      %177 = sbr.rel (%p43) target = $region41
    $region40: #{tpu_custom_call.1} parent=1 // pred_region
      %v178 = vld [vmem:[#allocation2] sm:$0x3]
      %v179 = vmul.f32 %v178, 0.00390625
      %v180 = vld [vmem:[%s2] sm:$0x1]
      %v182 = vlaneseq
      %v183 = vshrl.u32 %v182, 7
      %v184 = vsub.s32 0, %v183
      %v185 = vrot.slane %v180, %v184
      %v187 = vadd.f32 %v179, %v185
      %v188 = vmax.f32 %v187, 0.0
      %v189 = vld [vmem:[%s3] sm:$0xff]
      %v190 = vld [vmem:[%s3 + $0x8] sm:$0xff]
      %v191 = vld [vmem:[%s3 + $0x10] sm:$0xff]
      %v192 = vld [vmem:[%s3 + $0x18] sm:$0xff]
      %v193 = vld [vmem:[%s4] sm:$0x1]
      %v195 = vlaneseq
      %v196 = vshrl.u32 %v195, 7
      %v197 = vsub.s32 0, %v196
      %v198 = vrot.slane %v193, %v197
      %vm200 = vcmask 261120
      %v202 = vsel %vm200, %v188, 0
      %204 = vmatprep.subr.mxu0 0.0
      %205 = vmatpush1.msra.mxu0 %v189
      %206 = vmatprep.subr.mxu0 0.0
      %207 = vmatpush1.msra.mxu0 %v190
      %208 = vmatprep.subr.mxu0 0.0
      %209 = vmatpush1.msra.mxu0 %v191
      %210 = vmatprep.subr.mxu0 0.0
      %211 = vmatpush1.msra.mxu0 %v192
      %212 = vmatprep.subr.mxu0 0.0
      %213 = vmatpush1.msra.mxu0 0.0
      %214 = vmatprep.subr.mxu0 0.0
      %215 = vmatpush1.msra.mxu0 0.0
      %216 = vmatprep.subr.mxu0 0.0
      %217 = vmatpush1.msra.mxu0 0.0
      %218 = vmatprep.subr.mxu0 0.0
      %219 = vmatpush1.msra.mxu0 0.0
      %220 = vmatprep.subr.mxu0 0.0
      %221 = vmatpush1.msra.mxu0 0.0
      %222 = vmatprep.subr.mxu0 0.0
      %223 = vmatpush1.msra.mxu0 0.0
      %224 = vmatprep.subr.mxu0 0.0
      %225 = vmatpush1.msra.mxu0 0.0
      %226 = vmatprep.subr.mxu0 0.0
      %227 = vmatpush1.msra.mxu0 0.0
      %228 = vmatprep.subr.mxu0 0.0
      %229 = vmatpush1.msra.mxu0 0.0
      %230 = vmatprep.subr.mxu0 0.0
      %231 = vmatpush1.msra.mxu0 0.0
      %232 = vmatprep.subr.mxu0 0.0
      %233 = vmatpush1.msra.mxu0 0.0
      %234 = vmatprep.subr.mxu0 0.0
      %235 = vmatpush1.msra.mxu0 0.0
      %236 = vmatprep.subr.mxu0 0.0
      %237 = vmatpush1.msra.mxu0 0.0
      %238 = vmatprep.subr.mxu0 0.0
      %239 = vmatpush1.msra.mxu0 0.0
      %240 = vmatprep.subr.mxu0 0.0
      %241 = vmatpush1.msra.mxu0 0.0
      %242 = vmatprep.subr.mxu0 0.0
      %243 = vmatpush1.msra.mxu0 0.0
      %244 = vmatprep.subr.mxu0 0.0
      %245 = vmatpush1.msra.mxu0 0.0
      %246 = vmatprep.subr.mxu0 0.0
      %247 = vmatpush1.msra.mxu0 0.0
      %248 = vmatprep.subr.mxu0 0.0
      %249 = vmatpush1.msra.mxu0 0.0
      %250 = vmatprep.subr.mxu0 0.0
      %251 = vmatpush1.msra.mxu0 0.0
      %252 = vmatprep.subr.mxu0 0.0
      %253 = vmatpush1.msra.mxu0 0.0
      %254 = vmatprep.subr.mxu0 0.0
      %255 = vmatpush1.msra.mxu0 0.0
      %256 = vmatprep.subr.mxu0 0.0
      %257 = vmatpush1.msra.mxu0 0.0
      %258 = vmatprep.subr.mxu0 0.0
      %259 = vmatpush1.msra.mxu0 0.0
      %260 = vmatprep.subr.mxu0 0.0
      %261 = vmatpush1.msra.mxu0 0.0
      %262 = vmatprep.subr.mxu0 0.0
      %263 = vmatpush1.msra.mxu0 0.0
      %264 = vmatprep.subr.mxu0 0.0
      %265 = vmatpush1.msra.mxu0 0.0
      %266 = vmatprep.subr.mxu0 0.0
      %267 = vmatpush1.msra.mxu0 0.0
      %268 = vmatprep.mubr.f32.mxu0 0.0
      %269 = vmatmul.mubr.f32.gmra.mrb[0].mxu0 %v202
      %v270 = vpop.f32.mrb[0].mxu0
      %v271 = vadd.f32 %v198, %v270
      %v272 = vpop.f32.mrb[0].mxu0
      %273 = vdwg.mxu0
      %v274 = vmax.f32 %v271, 0.0
      %v275 = vld [vmem:[%s5] sm:$0xff]
      %v276 = vld [vmem:[%s5 + $0x8] sm:$0xff]
      %v277 = vld [vmem:[%s5 + $0x10] sm:$0xff]
      %v278 = vld [vmem:[%s5 + $0x18] sm:$0xff]
      %v279 = vld [vmem:[%s6] sm:$0x1]
      %v281 = vlaneseq
      %v282 = vshrl.u32 %v281, 7
      %v283 = vsub.s32 0, %v282
      %v284 = vrot.slane %v279, %v283
      %v287 = vsel %vm200, %v274, 0
      %289 = vmatprep.subr.mxu0 0.0
      %290 = vmatpush1.msra.mxu0 %v275
      %291 = vmatprep.subr.mxu0 0.0
      %292 = vmatpush1.msra.mxu0 %v276
      %293 = vmatprep.subr.mxu0 0.0
      %294 = vmatpush1.msra.mxu0 %v277
      %295 = vmatprep.subr.mxu0 0.0
      %296 = vmatpush1.msra.mxu0 %v278
      %297 = vmatprep.subr.mxu0 0.0
      %298 = vmatpush1.msra.mxu0 0.0
      %299 = vmatprep.subr.mxu0 0.0
      %300 = vmatpush1.msra.mxu0 0.0
      %301 = vmatprep.subr.mxu0 0.0
      %302 = vmatpush1.msra.mxu0 0.0
      %303 = vmatprep.subr.mxu0 0.0
      %304 = vmatpush1.msra.mxu0 0.0
      %305 = vmatprep.subr.mxu0 0.0
      %306 = vmatpush1.msra.mxu0 0.0
      %307 = vmatprep.subr.mxu0 0.0
      %308 = vmatpush1.msra.mxu0 0.0
      %309 = vmatprep.subr.mxu0 0.0
      %310 = vmatpush1.msra.mxu0 0.0
      %311 = vmatprep.subr.mxu0 0.0
      %312 = vmatpush1.msra.mxu0 0.0
      %313 = vmatprep.subr.mxu0 0.0
      %314 = vmatpush1.msra.mxu0 0.0
      %315 = vmatprep.subr.mxu0 0.0
      %316 = vmatpush1.msra.mxu0 0.0
      %317 = vmatprep.subr.mxu0 0.0
      %318 = vmatpush1.msra.mxu0 0.0
      %319 = vmatprep.subr.mxu0 0.0
      %320 = vmatpush1.msra.mxu0 0.0
      %321 = vmatprep.subr.mxu0 0.0
      %322 = vmatpush1.msra.mxu0 0.0
      %323 = vmatprep.subr.mxu0 0.0
      %324 = vmatpush1.msra.mxu0 0.0
      %325 = vmatprep.subr.mxu0 0.0
      %326 = vmatpush1.msra.mxu0 0.0
      %327 = vmatprep.subr.mxu0 0.0
      %328 = vmatpush1.msra.mxu0 0.0
      %329 = vmatprep.subr.mxu0 0.0
      %330 = vmatpush1.msra.mxu0 0.0
      %331 = vmatprep.subr.mxu0 0.0
      %332 = vmatpush1.msra.mxu0 0.0
      %333 = vmatprep.subr.mxu0 0.0
      %334 = vmatpush1.msra.mxu0 0.0
      %335 = vmatprep.subr.mxu0 0.0
      %336 = vmatpush1.msra.mxu0 0.0
      %337 = vmatprep.subr.mxu0 0.0
      %338 = vmatpush1.msra.mxu0 0.0
      %339 = vmatprep.subr.mxu0 0.0
      %340 = vmatpush1.msra.mxu0 0.0
      %341 = vmatprep.subr.mxu0 0.0
      %342 = vmatpush1.msra.mxu0 0.0
      %343 = vmatprep.subr.mxu0 0.0
      %344 = vmatpush1.msra.mxu0 0.0
      %345 = vmatprep.subr.mxu0 0.0
      %346 = vmatpush1.msra.mxu0 0.0
      %347 = vmatprep.subr.mxu0 0.0
      %348 = vmatpush1.msra.mxu0 0.0
      %349 = vmatprep.subr.mxu0 0.0
      %350 = vmatpush1.msra.mxu0 0.0
      %351 = vmatprep.subr.mxu0 0.0
      %352 = vmatpush1.msra.mxu0 0.0
      %353 = vmatprep.mubr.f32.mxu0 0.0
      %354 = vmatmul.mubr.f32.gmra.mrb[0].mxu0 %v287
      %v355 = vpop.f32.mrb[0].mxu0
      %v356 = vadd.f32 %v284, %v355
      %v357 = vpop.f32.mrb[0].mxu0
      %358 = vdwg.mxu0
      %vm359 = vcmask 58368
      %360 = vst.msk [vmem:[#allocation6] sm:$0x3] %vm359, %v356
    $region41: #{tpu_custom_call.1} parent=1 // pred_fallthru
      _
    // Predicated region
    $region42: #{tpu_custom_call.1} parent=1 // pred_check
      _
    $region43: #{tpu_custom_call.1} parent=1 // pred_check_branch
      %362 = sbr.rel (0) target = $region45
    $region44: #{tpu_custom_call.1} parent=1 // pred_region
      %s364 = ssub.s32 32, 32
      %365 = vsyncadd [#allocation5], %s364
      %s367 = sshll.u32 [#allocation6], 4
      %s368 = int_to_ptr.vmem [resolvable:$true] %s367
      %370 = dma.vmem_to_hbm [thread:$0]  %s368, 32, %s7, [#allocation5]
    $region45: #{tpu_custom_call.1} parent=1 // pred_fallthru
      _
    // Predicated region
    $region46: #{tpu_custom_call.1} parent=1 // pred_check
      _
    $region47: #{tpu_custom_call.1} parent=1 // pred_check_branch
      %372 = sbr.rel (0) target = $region49
    $region48: #{tpu_custom_call.1} parent=1 // pred_region
      %373 = dma.done [#allocation5], 32
    $region49: #{tpu_custom_call.1} parent=1 // pred_fallthru
      _
    %374 = vsyncpa [#allocation4], 1
    %375 = vsyncpa [#allocation5], 1

</llo_original>
